<compile_context>
chip_gen: v6e
topology: v6e:2x2x1
jax: 0.10.0
libtpu: 0.0.40
codegen_flags: <defaults>
</compile_context>

<pallas_src>
import jax
import jax.numpy as jnp
from jax.experimental import pallas as pl
from jax.experimental.pallas import tpu as pltpu

LANE = 128

# rows of the constant (8, LANE) parameter table
ROW_B_H = 0      # h_fc bias            (lanes 0:H)
ROW_B_BETA = 1   # beta_fc bias         (lanes H:H+K)
ROW_W_AMU = 2    # alpha_mu_fc weight^T (lanes 0:H)
ROW_W_ASIG = 3   # alpha_sigma weight^T (lanes 0:H)
ROW_B_AMU = 4    # alpha_mu_fc bias     (lane 0)
ROW_B_ASIG = 5   # alpha_sigma bias     (lane 0)
N_CONST_ROWS = 8

# rows of the dynamic (8, LANE) table (rebuilt per call, tiny)
ROW_SF_MU = 0    # effective stock_factor_mu    (lanes H:H+K)
ROW_SF_SIG = 1   # effective stock_factor_sigma (lanes H:H+K)
N_DYN_ROWS = 8


def _leaky_relu(x, slope=0.01):
    return jnp.where(x >= 0, x, slope * x)


def _softplus(x):
    # matches torch.nn.Softplus(beta=1), numerically stable
    return jnp.logaddexp(x, 0.0)


def single_factor_decoder_kernel(es_ref, wcat_ref, vc_ref, dyn_ref, out_ref):
    f32 = jnp.float32

    # ---- single MXU pass: (S_pad, H) @ (H, LANE) ----------------------------
    # lanes 0:H   -> es @ w_h      (h pre-activation)
    # lanes H:H+K -> es @ w_beta   (beta pre-activation)
    # lanes H+K:  -> 0
    y = jnp.dot(es_ref[...], wcat_ref[...], preferred_element_type=f32)

    # h: garbage beyond lane H is masked out later by zero alpha-head weights
    h_full = _leaky_relu(y + vc_ref[ROW_B_H:ROW_B_H + 1, :])

    # ---- alpha heads as VPU multiplies + lane reductions --------------------
    alpha_mu = (jnp.sum(h_full * vc_ref[ROW_W_AMU:ROW_W_AMU + 1, :],
                        axis=-1, keepdims=True)
                + vc_ref[ROW_B_AMU:ROW_B_AMU + 1, 0:1])                    # (S, 1)
    alpha_sig = _softplus(
        jnp.sum(h_full * vc_ref[ROW_W_ASIG:ROW_W_ASIG + 1, :],
                axis=-1, keepdims=True)
        + vc_ref[ROW_B_ASIG:ROW_B_ASIG + 1, 0:1])                          # (S, 1)

    # ---- beta / factor contraction (lanes outside H:H+K contribute zero) ----
    beta_full = y + vc_ref[ROW_B_BETA:ROW_B_BETA + 1, :]                   # (S, LANE)
    sf_mu = dyn_ref[ROW_SF_MU:ROW_SF_MU + 1, :]                            # (1, LANE)
    sf_sig = dyn_ref[ROW_SF_SIG:ROW_SF_SIG + 1, :]                         # (1, LANE)

    rt_mu = alpha_mu + jnp.sum(beta_full * sf_mu, axis=-1, keepdims=True)
    rt_sigma = jnp.sqrt(alpha_sig * alpha_sig
                        + jnp.sum((beta_full * beta_full) * (sf_sig * sf_sig),
                                  axis=-1, keepdims=True))

    # ---- single lane-dense store: rt_mu in lane 0, rt_sigma in lane 1 -------
    lane = jax.lax.broadcasted_iota(jnp.int32, out_ref.shape, 1)
    out_ref[...] = (jnp.where(lane == 0, rt_mu, 0.0)
                    + jnp.where(lane == 1, rt_sigma, 0.0))


def pack_params(params, H, K, M):
    """One-time packing of all parameters (done at init, not per call)."""
    assert H + K <= LANE
    f32 = jnp.float32

    # fused 128-wide RHS: [ w_h | w_beta | 0 ]
    w_cat = jnp.zeros((H, LANE), f32)
    w_cat = w_cat.at[:, :H].set(params["w_h"].astype(f32))
    w_cat = w_cat.at[:, H:H + K].set(params["w_beta"].astype(f32))

    vec = jnp.zeros((N_CONST_ROWS, LANE), f32)
    vec = vec.at[ROW_B_H, :H].set(params["b_h"].astype(f32))
    vec = vec.at[ROW_B_BETA, H:H + K].set(params["b_beta"].astype(f32))
    vec = vec.at[ROW_W_AMU, :H].set(params["w_amu"][:, 0].astype(f32))
    vec = vec.at[ROW_W_ASIG, :H].set(params["w_asig"][:, 0].astype(f32))
    vec = vec.at[ROW_B_AMU, 0].set(params["b_amu"][0].astype(f32))
    vec = vec.at[ROW_B_ASIG, 0].set(params["b_asig"][0].astype(f32))

    return {
        "w_cat": w_cat,
        "vec_const": vec,
        # tiny (M x K) market-layer params; folded in the wrapper (16 MACs each)
        "w_mm": params["w_mm"].astype(f32),
        "b_mm": params["b_mm"].astype(f32),
        "w_ms": params["w_ms"].astype(f32),
        "b_ms": params["b_ms"].astype(f32),
    }


@jax.jit
def single_factor_decoder(packed, stock_factor_mu, stock_factor_sigma, es,
                          market_factor_mu, market_factor_sigma):
    """Full forward in one pallas_call; returns (rt_mu, rt_sigma) of shape (S,)."""
    f32 = jnp.float32
    S, H = es.shape
    K = packed["w_mm"].shape[1]
    S_pad = -(-S // 8) * 8

    # fold the two 4x4 market linears here (cheaper than a dedicated MXU pass)
    sf_mu_eff = (stock_factor_mu.astype(f32)
                 + market_factor_mu.astype(f32) @ packed["w_mm"] + packed["b_mm"])
    sf_sig_eff = (stock_factor_sigma.astype(f32)
                  + market_factor_sigma.astype(f32) @ packed["w_ms"] + packed["b_ms"])

    dyn = jnp.zeros((N_DYN_ROWS, LANE), f32)
    dyn = dyn.at[ROW_SF_MU, H:H + K].set(sf_mu_eff)
    dyn = dyn.at[ROW_SF_SIG, H:H + K].set(sf_sig_eff)

    es_p = es.astype(f32)
    if S_pad != S:
        es_p = jnp.zeros((S_pad, H), f32).at[:S, :].set(es_p)

    vmem = pl.BlockSpec(memory_space=pltpu.MemorySpace.VMEM)
    bytes_accessed = 4 * (S_pad * H + H * LANE + N_CONST_ROWS * LANE
                          + N_DYN_ROWS * LANE + S_pad * LANE)
    out = pl.pallas_call(
        single_factor_decoder_kernel,
        out_shape=jax.ShapeDtypeStruct((S_pad, LANE), f32),
        in_specs=[vmem, vmem, vmem, vmem],
        out_specs=vmem,
        cost_estimate=pl.CostEstimate(
            flops=2 * S_pad * H * LANE + 8 * S_pad * LANE,
            transcendentals=2 * S_pad,
            bytes_accessed=bytes_accessed),
    )(es_p, packed["w_cat"], packed["vec_const"], dyn)

    return out[:S, 0], out[:S, 1]


def init_params(key, H_stock, num_stock_factor, num_market_factor):
    """Deterministic synthetic parameters. Linear weights stored as (in, out) = PyTorch W.T."""
    ks = jax.random.split(key, 12)

    def w(k, shape, scale=0.3):
        return (scale * jax.random.normal(k, shape)).astype(jnp.float32)

    return {
        "w_mm":   w(ks[0], (num_market_factor, num_stock_factor)),
        "b_mm":   w(ks[1], (num_stock_factor,)),
        "w_ms":   w(ks[2], (num_market_factor, num_stock_factor)),
        "b_ms":   w(ks[3], (num_stock_factor,)),
        "w_h":    w(ks[4], (H_stock, H_stock)),
        "b_h":    w(ks[5], (H_stock,)),
        "w_amu":  w(ks[6], (H_stock, 1)),
        "b_amu":  w(ks[7], (1,)),
        "w_asig": w(ks[8], (H_stock, 1)),
        "b_asig": w(ks[9], (1,)),
        "w_beta": w(ks[10], (H_stock, num_stock_factor)),
        "b_beta": w(ks[11], (num_stock_factor,)),
    }


def reference_forward(params, sf_mu, sf_sig, es, mf_mu, mf_sig):
    """Pure-JAX reference mirroring the PyTorch forward."""
    market_mu_info = mf_mu @ params["w_mm"] + params["b_mm"]
    market_sig_info = mf_sig @ params["w_ms"] + params["b_ms"]
    sf_mu = sf_mu + market_mu_info
    sf_sig = sf_sig + market_sig_info
    h = jax.nn.leaky_relu(es @ params["w_h"] + params["b_h"], negative_slope=0.01)
    alpha_mu = (h @ params["w_amu"] + params["b_amu"])[:, 0]
    alpha_sigma = jax.nn.softplus((h @ params["w_asig"] + params["b_asig"])[:, 0])
    beta = es @ params["w_beta"] + params["b_beta"]
    rt_mu = alpha_mu + beta @ sf_mu
    rt_sigma = jnp.sqrt(alpha_sigma ** 2 + (beta ** 2) @ (sf_sig ** 2))
    return rt_mu, rt_sigma


if __name__ == "__main__":
    H_stock = 32
    num_stock_factor = 4
    num_market_factor = 4
    stock_size = 8

    key = jax.random.PRNGKey(0)
    k_p, k1, k2, k3, k4, k5 = jax.random.split(key, 6)

    params = init_params(k_p, H_stock, num_stock_factor, num_market_factor)
    packed = pack_params(params, H_stock, num_stock_factor, num_market_factor)

    stock_factor_mu = jax.random.normal(k1, (num_stock_factor,), dtype=jnp.float32)
    stock_factor_sigma = jnp.abs(jax.random.normal(k2, (num_stock_factor,), dtype=jnp.float32)) + 0.1
    es = jax.random.normal(k3, (stock_size, H_stock), dtype=jnp.float32)
    market_factor_mu = jax.random.normal(k4, (num_market_factor,), dtype=jnp.float32)
    market_factor_sigma = jnp.abs(jax.random.normal(k5, (num_market_factor,), dtype=jnp.float32)) + 0.1

    rt_mu, rt_sigma = single_factor_decoder(
        packed, stock_factor_mu, stock_factor_sigma, es,
        market_factor_mu, market_factor_sigma)
    jax.block_until_ready((rt_mu, rt_sigma))

    ref_mu, ref_sigma = reference_forward(
        params, stock_factor_mu, stock_factor_sigma, es,
        market_factor_mu, market_factor_sigma)

    assert rt_mu.shape == (stock_size,) and rt_sigma.shape == (stock_size,)
    assert jnp.allclose(rt_mu, ref_mu, atol=1e-4, rtol=1e-4)
    assert jnp.allclose(rt_sigma, ref_sigma, atol=1e-4, rtol=1e-4)

    print("KERNEL_OK")
</pallas_src>

<mosaic_0001>
module attributes {stable_mosaic.version = 11 : i64} {
  func.func @single_factor_decoder_kernel(%arg0: memref<8x32xf32, #tpu.memory_space<vmem>>, %arg1: memref<32x128xf32, #tpu.memory_space<vmem>>, %arg2: memref<8x128xf32, #tpu.memory_space<vmem>>, %arg3: memref<8x128xf32, #tpu.memory_space<vmem>>, %arg4: memref<8x128xf32, #tpu.memory_space<vmem>>) attributes {dimension_semantics = [], scalar_prefetch = 0 : i64, scratch_operands = 0 : i64, tpu.core_type = #tpu.core_type<tc>} {
    %c0 = arith.constant 0 : index
    %c0_0 = arith.constant 0 : index
    %0 = vector.load %arg0[%c0, %c0_0] : memref<8x32xf32, #tpu.memory_space<vmem>>, vector<8x32xf32>
    %c0_1 = arith.constant 0 : index
    %c0_2 = arith.constant 0 : index
    %1 = vector.load %arg1[%c0_1, %c0_2] : memref<32x128xf32, #tpu.memory_space<vmem>>, vector<32x128xf32>
    %cst = arith.constant dense<0.000000e+00> : vector<8x128xf32>
    %2 = tpu.matmul %0, %1, %cst {dimension_numbers = #tpu.dot_dimension_numbers<[1], [0], [0], [1], [0, 0, 1, 1], [], []>} : vector<8x32xf32>, vector<32x128xf32>, vector<8x128xf32> -> vector<8x128xf32>
    %c0_3 = arith.constant 0 : index
    %c0_4 = arith.constant 0 : index
    %3 = vector.load %arg2[%c0_3, %c0_4] : memref<8x128xf32, #tpu.memory_space<vmem>>, vector<1x128xf32>
    %4 = vector.broadcast %3 : vector<1x128xf32> to vector<8x128xf32>
    %5 = arith.addf %2, %4 : vector<8x128xf32>
    %cst_5 = arith.constant 0.000000e+00 : f32
    %6 = vector.broadcast %cst_5 : f32 to vector<8x128xf32>
    %7 = arith.cmpf oge, %5, %6 : vector<8x128xf32>
    %cst_6 = arith.constant 0.00999999977 : f32
    %8 = vector.broadcast %cst_6 : f32 to vector<8x128xf32>
    %9 = arith.mulf %8, %5 : vector<8x128xf32>
    %10 = arith.select %7, %5, %9 : vector<8x128xi1>, vector<8x128xf32>
    %c2 = arith.constant 2 : index
    %c0_7 = arith.constant 0 : index
    %11 = vector.load %arg2[%c2, %c0_7] : memref<8x128xf32, #tpu.memory_space<vmem>>, vector<1x128xf32>
    %12 = vector.broadcast %11 : vector<1x128xf32> to vector<8x128xf32>
    %13 = arith.mulf %10, %12 : vector<8x128xf32>
    %cst_8 = arith.constant dense<0.000000e+00> : vector<8xf32>
    %14 = vector.multi_reduction <add>, %13, %cst_8 [1] : vector<8x128xf32> to vector<8xf32>
    %15 = vector.shape_cast %14 : vector<8xf32> to vector<8x1xf32>
    %c4 = arith.constant 4 : index
    %c0_9 = arith.constant 0 : index
    %16 = vector.load %arg2[%c4, %c0_9] : memref<8x128xf32, #tpu.memory_space<vmem>>, vector<1x1xf32>
    %17 = vector.broadcast %16 : vector<1x1xf32> to vector<8x1xf32>
    %18 = arith.addf %15, %17 : vector<8x1xf32>
    %c3 = arith.constant 3 : index
    %c0_10 = arith.constant 0 : index
    %19 = vector.load %arg2[%c3, %c0_10] : memref<8x128xf32, #tpu.memory_space<vmem>>, vector<1x128xf32>
    %20 = vector.broadcast %19 : vector<1x128xf32> to vector<8x128xf32>
    %21 = arith.mulf %10, %20 : vector<8x128xf32>
    %cst_11 = arith.constant dense<0.000000e+00> : vector<8xf32>
    %22 = vector.multi_reduction <add>, %21, %cst_11 [1] : vector<8x128xf32> to vector<8xf32>
    %23 = vector.shape_cast %22 : vector<8xf32> to vector<8x1xf32>
    %c5 = arith.constant 5 : index
    %c0_12 = arith.constant 0 : index
    %24 = vector.load %arg2[%c5, %c0_12] : memref<8x128xf32, #tpu.memory_space<vmem>>, vector<1x1xf32>
    %25 = vector.broadcast %24 : vector<1x1xf32> to vector<8x1xf32>
    %26 = arith.addf %23, %25 : vector<8x1xf32>
    %cst_13 = arith.constant 0.000000e+00 : f32
    %27 = vector.broadcast %cst_13 : f32 to vector<8x1xf32>
    %28 = arith.maximumf %26, %27 : vector<8x1xf32>
    %29 = vector.broadcast %cst_13 : f32 to vector<8x1xf32>
    %30 = arith.subf %26, %29 : vector<8x1xf32>
    %31 = arith.cmpf one, %30, %30 : vector<8x1xf32>
    %32 = vector.broadcast %cst_13 : f32 to vector<8x1xf32>
    %33 = arith.addf %26, %32 : vector<8x1xf32>
    %34 = math.absf %30 : vector<8x1xf32>
    %cst_14 = arith.constant 0.000000e+00 : f32
    %35 = vector.broadcast %cst_14 : f32 to vector<8x1xf32>
    %36 = arith.subf %35, %34 : vector<8x1xf32>
    %37 = math.exp %36 : vector<8x1xf32>
    %38 = math.log1p %37 : vector<8x1xf32>
    %39 = arith.addf %28, %38 : vector<8x1xf32>
    %40 = arith.select %31, %33, %39 : vector<8x1xi1>, vector<8x1xf32>
    %c1 = arith.constant 1 : index
    %c0_15 = arith.constant 0 : index
    %41 = vector.load %arg2[%c1, %c0_15] : memref<8x128xf32, #tpu.memory_space<vmem>>, vector<1x128xf32>
    %42 = vector.broadcast %41 : vector<1x128xf32> to vector<8x128xf32>
    %43 = arith.addf %2, %42 : vector<8x128xf32>
    %c0_16 = arith.constant 0 : index
    %c0_17 = arith.constant 0 : index
    %44 = vector.load %arg3[%c0_16, %c0_17] : memref<8x128xf32, #tpu.memory_space<vmem>>, vector<1x128xf32>
    %c1_18 = arith.constant 1 : index
    %c0_19 = arith.constant 0 : index
    %45 = vector.load %arg3[%c1_18, %c0_19] : memref<8x128xf32, #tpu.memory_space<vmem>>, vector<1x128xf32>
    %46 = vector.broadcast %44 : vector<1x128xf32> to vector<8x128xf32>
    %47 = arith.mulf %43, %46 : vector<8x128xf32>
    %cst_20 = arith.constant dense<0.000000e+00> : vector<8xf32>
    %48 = vector.multi_reduction <add>, %47, %cst_20 [1] : vector<8x128xf32> to vector<8xf32>
    %49 = vector.shape_cast %48 : vector<8xf32> to vector<8x1xf32>
    %50 = arith.addf %18, %49 : vector<8x1xf32>
    %51 = arith.mulf %40, %40 : vector<8x1xf32>
    %52 = arith.mulf %43, %43 : vector<8x128xf32>
    %53 = arith.mulf %45, %45 : vector<1x128xf32>
    %54 = vector.broadcast %53 : vector<1x128xf32> to vector<8x128xf32>
    %55 = arith.mulf %52, %54 : vector<8x128xf32>
    %cst_21 = arith.constant dense<0.000000e+00> : vector<8xf32>
    %56 = vector.multi_reduction <add>, %55, %cst_21 [1] : vector<8x128xf32> to vector<8xf32>
    %57 = vector.shape_cast %56 : vector<8xf32> to vector<8x1xf32>
    %58 = arith.addf %51, %57 : vector<8x1xf32>
    %59 = math.sqrt %58 : vector<8x1xf32>
    %60 = tpu.iota {dimensions = array<i32: 1>} : vector<8x128xi32>
    %c0_i32 = arith.constant 0 : i32
    %61 = vector.broadcast %c0_i32 : i32 to vector<8x128xi32>
    %62 = arith.cmpi eq, %60, %61 : vector<8x128xi32>
    %cst_22 = arith.constant 0.000000e+00 : f32
    %63 = vector.shape_cast %50 : vector<8x1xf32> to vector<8x1xf32>
    %64 = vector.broadcast %63 : vector<8x1xf32> to vector<8x128xf32>
    %65 = vector.broadcast %cst_22 : f32 to vector<8x128xf32>
    %66 = arith.select %62, %64, %65 : vector<8x128xi1>, vector<8x128xf32>
    %c1_i32 = arith.constant 1 : i32
    %67 = vector.broadcast %c1_i32 : i32 to vector<8x128xi32>
    %68 = arith.cmpi eq, %60, %67 : vector<8x128xi32>
    %cst_23 = arith.constant 0.000000e+00 : f32
    %69 = vector.shape_cast %59 : vector<8x1xf32> to vector<8x1xf32>
    %70 = vector.broadcast %69 : vector<8x1xf32> to vector<8x128xf32>
    %71 = vector.broadcast %cst_23 : f32 to vector<8x128xf32>
    %72 = arith.select %68, %70, %71 : vector<8x128xi1>, vector<8x128xf32>
    %73 = arith.addf %66, %72 : vector<8x128xf32>
    %c0_24 = arith.constant 0 : index
    %c0_25 = arith.constant 0 : index
    %74 = vector.load %arg4[%c0_24, %c0_25] : memref<8x128xf32, #tpu.memory_space<vmem>>, vector<8x128xf32>
    tpu.vector_store %arg4[%c0_24, %c0_25], %73 {strides = array<i32>} : memref<8x128xf32, #tpu.memory_space<vmem>>, vector<8x128xf32>,
    return
  }
}

</mosaic_0001>

<llo_original>
// kernel: single_factor_decoder.1
$region0: #{single_factor_decoder.1}
  #allocation0 [shape = 'u32[]', space=smem, size = 0x4, offset = 0x4, fixed_abs, tag = 'smem constant byte address 0x4 - core index']
  #allocation1 [shape = 'u32[144,128]{1,0:T(1,128)}', space=vmem, size = 0x12000, scoped, tag = 'internal scratch']
  %s0 = inlined_call_operand.vmem [shape: f32[8,32], index: 0, kind: input, shape index: {}]
  %s1 = inlined_call_operand.vmem [shape: f32[32,128], index: 1, kind: input, shape index: {}]
  %s2 = inlined_call_operand.vmem [shape: f32[8,128], index: 2, kind: input, shape index: {}]
  %s3 = inlined_call_operand.vmem [shape: f32[8,128], index: 3, kind: input, shape index: {}]
  %s4 = inlined_call_operand.vmem [shape: f32[8,128], index: 4, kind: output, shape index: {}]
  %s5 = sld [smem:[#allocation0]]
  $region26: #{single_factor_decoder.1} parent=0
    _
  %s7 = ssub.s32 1, %s5
  %s8 = scalar_select 0, %s7, %s5
  // Predicated region
  $region2: #{single_factor_decoder.1} parent=0 // pred_check
    _
  $region3: #{single_factor_decoder.1} parent=0 // pred_check_branch
    %10 = sbr.rel (0) target = $region5
  $region4: #{single_factor_decoder.1} parent=0 // pred_region
    _
  $region5: #{single_factor_decoder.1} parent=0 // pred_fallthru
    _
  // Predicated region
  $region6: #{single_factor_decoder.1} parent=0 // pred_check
    _
  $region7: #{single_factor_decoder.1} parent=0 // pred_check_branch
    %12 = sbr.rel (0) target = $region9
  $region8: #{single_factor_decoder.1} parent=0 // pred_region
    _
  $region9: #{single_factor_decoder.1} parent=0 // pred_fallthru
    _
  // Predicated region
  $region10: #{single_factor_decoder.1} parent=0 // pred_check
    _
  $region11: #{single_factor_decoder.1} parent=0 // pred_check_branch
    %14 = sbr.rel (0) target = $region13
  $region12: #{single_factor_decoder.1} parent=0 // pred_region
    _
  $region13: #{single_factor_decoder.1} parent=0 // pred_fallthru
    _
  // Predicated region
  $region14: #{single_factor_decoder.1} parent=0 // pred_check
    _
  $region15: #{single_factor_decoder.1} parent=0 // pred_check_branch
    %16 = sbr.rel (0) target = $region17
  $region16: #{single_factor_decoder.1} parent=0 // pred_region
    _
  $region17: #{single_factor_decoder.1} parent=0 // pred_fallthru
    _
  %v17 = vld [vmem:[%s0] sm:$0xff]
  %v18 = vld [vmem:[%s1] sm:$0xff]
  %v19 = vld [vmem:[%s1 + $0x8] sm:$0xff]
  %v20 = vld [vmem:[%s1 + $0x10] sm:$0xff]
  %v21 = vld [vmem:[%s1 + $0x18] sm:$0xff]
  %vm22 = vcmask 261120
  %v24 = vsel %vm22, %v17, 0
  %26 = vmatprep.subr.mxu0 0.0
  %27 = vmatpush1.msra.mxu0 0.0
  %28 = vmatprep.subr.mxu0 0.0
  %29 = vmatpush1.msra.mxu0 0.0
  %30 = vmatprep.subr.mxu0 0.0
  %31 = vmatpush1.msra.mxu0 0.0
  %32 = vmatprep.subr.mxu0 0.0
  %33 = vmatpush1.msra.mxu0 0.0
  %34 = vmatprep.subr.mxu0 0.0
  %35 = vmatpush1.msra.mxu0 0.0
  %36 = vmatprep.subr.mxu0 0.0
  %37 = vmatpush1.msra.mxu0 0.0
  %38 = vmatprep.subr.mxu0 0.0
  %39 = vmatpush1.msra.mxu0 0.0
  %40 = vmatprep.subr.mxu0 0.0
  %41 = vmatpush1.msra.mxu0 0.0
  %42 = vmatprep.subr.mxu0 0.0
  %43 = vmatpush1.msra.mxu0 0.0
  %44 = vmatprep.subr.mxu0 0.0
  %45 = vmatpush1.msra.mxu0 0.0
  %46 = vmatprep.subr.mxu0 0.0
  %47 = vmatpush1.msra.mxu0 0.0
  %48 = vmatprep.subr.mxu0 0.0
  %49 = vmatpush1.msra.mxu0 0.0
  %50 = vmatprep.subr.mxu0 0.0
  %51 = vmatpush1.msra.mxu0 %v21
  %52 = vmatprep.subr.mxu0 0.0
  %53 = vmatpush1.msra.mxu0 %v20
  %54 = vmatprep.subr.mxu0 0.0
  %55 = vmatpush1.msra.mxu0 %v19
  %56 = vmatprep.subr.mxu0 0.0
  %57 = vmatpush1.msra.mxu0 %v18
  %58 = vmatprep.subr.mxu0 0.0
  %59 = vmatpush2.msra.mxu0 0.0
  %60 = vmatprep.subr.mxu0 0.0
  %61 = vmatpush2.msra.mxu0 0.0
  %62 = vmatprep.subr.mxu0 0.0
  %63 = vmatpush2.msra.mxu0 0.0
  %64 = vmatprep.subr.mxu0 0.0
  %65 = vmatpush2.msra.mxu0 0.0
  %66 = vmatprep.subr.mxu0 0.0
  %67 = vmatpush2.msra.mxu0 0.0
  %68 = vmatprep.subr.mxu0 0.0
  %69 = vmatpush2.msra.mxu0 0.0
  %70 = vmatprep.subr.mxu0 0.0
  %71 = vmatpush2.msra.mxu0 0.0
  %72 = vmatprep.subr.mxu0 0.0
  %73 = vmatpush2.msra.mxu0 0.0
  %74 = vmatprep.subr.mxu0 0.0
  %75 = vmatpush2.msra.mxu0 0.0
  %76 = vmatprep.subr.mxu0 0.0
  %77 = vmatpush2.msra.mxu0 0.0
  %78 = vmatprep.subr.mxu0 0.0
  %79 = vmatpush2.msra.mxu0 0.0
  %80 = vmatprep.subr.mxu0 0.0
  %81 = vmatpush2.msra.mxu0 0.0
  %82 = vmatprep.subr.mxu0 0.0
  %83 = vmatpush2.msra.mxu0 0.0
  %84 = vmatprep.subr.mxu0 0.0
  %85 = vmatpush2.msra.mxu0 0.0
  %86 = vmatprep.subr.mxu0 0.0
  %87 = vmatpush2.msra.mxu0 0.0
  %88 = vmatprep.subr.mxu0 0.0
  %89 = vmatpush2.msra.mxu0 0.0
  %90 = vmatprep.mubr.f32.mxu0 0.0
  %91 = vmatmul.mubr.f32.gmra.mxu0 %v24
  %v92 = vpop.f32.mrf.mxu0
  %v93 = vadd.f32 0.0, %v92
  %v94 = vpop.f32.mrf.mxu0
  %95 = vdwg.mxu0
  %v96 = vld [vmem:[%s2] sm:$0x1]
  %v97 = vlaneseq
  %v98 = vshrl.u32 %v97, 7
  %v99 = vsub.s32 0, %v98
  %v100 = vrot.slane %v96, %v99
  %v101 = vadd.f32 %v93, %v100
  %vm102 = vcmp.ge.f32.partialorder %v101, 0.0
  %v103 = vmul.f32 %v101, 0.01
  %v104 = vsel %vm102, %v101, %v103
  %v105 = vld [vmem:[%s2 + $0x2] sm:$0x1]
  %v106 = vlaneseq
  %v107 = vshrl.u32 %v106, 7
  %v108 = vsub.s32 0, %v107
  %v109 = vrot.slane %v105, %v108
  %v110 = vmul.f32 %v104, %v109
  %111 = vadd.xlane.f32.xlu0 %v110
  %v112 = vpop.xlane.xlu0 %111
  %v113 = vld [vmem:[%s2 + $0x4] sm:$0x1]
  %v114 = vlaneseq
  %v115 = vshrl.u32 %v114, 7
  %v116 = vsub.s32 0, %v115
  %v117 = vrot.slane %v113, %v116
  %v118 = vadd.f32 %v112, %v117
  %v119 = vld [vmem:[%s2 + $0x3] sm:$0x1]
  %v120 = vlaneseq
  %v121 = vshrl.u32 %v120, 7
  %v122 = vsub.s32 0, %v121
  %v123 = vrot.slane %v119, %v122
  %v124 = vmul.f32 %v104, %v123
  %125 = vadd.xlane.f32.xlu0 %v124
  %v126 = vpop.xlane.xlu0 %125
  %v127 = vld [vmem:[%s2 + $0x5] sm:$0x1]
  %v128 = vlaneseq
  %v129 = vshrl.u32 %v128, 7
  %v130 = vsub.s32 0, %v129
  %v131 = vrot.slane %v127, %v130
  %v132 = vadd.f32 %v126, %v131
  %v133 = vmax.f32 %v132, 0.0
  %vm134 = vcmp.ne.f32.partialorder %v132, %v132
  %v135 = vadd.f32 %v132, 0.0
  %v136 = vand.u32 2147483647, %v132
  %v137 = vsub.f32 0.0, %v136
  %v138 = vmul.f32 %v137, 1.442695
  %v139 = vpow.pop %v138
  %v140 = vadd.f32 %v139, 1.0
  %v141 = vlog2.pop %v140
  %v142 = vmul.f32 %v141, 0.6931472
  %v143 = vmul.f32 -0.5, %v139
  %v144 = vadd.f32 %v143, 1.0
  %v145 = vmul.f32 %v144, %v139
  %v146 = vand.u32 2147483647, %v139
  %vm147 = vcmp.lt.f32.partialorder %v146, 0.0004427343
  %v148 = vsel %vm147, %v145, %v142
  %v149 = vadd.f32 %v133, %v148
  %v150 = vsel %vm134, %v135, %v149
  %v151 = vld [vmem:[%s2 + $0x1] sm:$0x1]
  %v152 = vlaneseq
  %v153 = vshrl.u32 %v152, 7
  %v154 = vsub.s32 0, %v153
  %v155 = vrot.slane %v151, %v154
  %v156 = vadd.f32 %v93, %v155
  %v157 = vld [vmem:[%s3] sm:$0x1]
  %v158 = vld [vmem:[%s3 + $0x1] sm:$0x1]
  %v159 = vlaneseq
  %v160 = vshrl.u32 %v159, 7
  %v161 = vsub.s32 0, %v160
  %v162 = vrot.slane %v157, %v161
  %v163 = vmul.f32 %v156, %v162
  %164 = vadd.xlane.f32.xlu0 %v163
  %v165 = vpop.xlane.xlu0 %164
  %v166 = vadd.f32 %v118, %v165
  %v167 = vmul.f32 %v150, %v150
  %v168 = vmul.f32 %v156, %v156
  %v169 = vmul.f32 %v158, %v158
  %v170 = vlaneseq
  %v171 = vshrl.u32 %v170, 7
  %v172 = vsub.s32 0, %v171
  %v173 = vrot.slane %v169, %v172
  %v174 = vmul.f32 %v168, %v173
  %175 = vadd.xlane.f32.xlu0 %v174
  %v176 = vpop.xlane.xlu0 %175
  %v177 = vadd.f32 %v167, %v176
  %v178 = vrsqrt.pop %v177
  %v179 = vmul.f32 %v177, %v178
  %vm180 = vcmp.eq.f32.partialorder %v177, inf
  %v181 = vsel %vm180, %v177, %v179
  %vm182 = vcmp.eq.f32.partialorder %v177, 0.0
  %v183 = vand.u32 %v177, 2147483648
  %v184 = vsel %vm182, %v183, %v181
  %v185 = vlaneseq
  %v186 = vand.u32 %v185, 127
  %vm187 = vcmp.eq.s32.totalorder %v186, 0
  %189 = vset.pattern.permute.xlu0 0
  %190 = vperm.xlu0 %189, %v166
  %v191 = vpop.permute.xlu0 %190
  %v193 = vsel %vm187, %v191, 0.0
  %vm194 = vcmp.eq.s32.totalorder %v186, 1
  %196 = vset.pattern.permute.xlu0 0
  %197 = vperm.xlu0 %196, %v184
  %v198 = vpop.permute.xlu0 %197
  %v200 = vsel %vm194, %v198, 0.0
  %v201 = vadd.f32 %v193, %v200
  %202 = vst [vmem:[%s4] sm:$0xff] %v201
  // Predicated region
  $region18: #{single_factor_decoder.1} parent=0 // pred_check
    _
  $region19: #{single_factor_decoder.1} parent=0 // pred_check_branch
    %204 = sbr.rel (0) target = $region21
  $region20: #{single_factor_decoder.1} parent=0 // pred_region
    _
  $region21: #{single_factor_decoder.1} parent=0 // pred_fallthru
    _
  // Predicated region
  $region22: #{single_factor_decoder.1} parent=0 // pred_check
    _
  $region23: #{single_factor_decoder.1} parent=0 // pred_check_branch
    %206 = sbr.rel (0) target = $region25
  $region24: #{single_factor_decoder.1} parent=0 // pred_region
    _
  $region25: #{single_factor_decoder.1} parent=0 // pred_fallthru
    _

</llo_original>
